<compile_context>
chip_gen: v5e
topology: v5e:2x2
jax: 0.10.0
libtpu: 0.0.40
codegen_flags: <defaults>
</compile_context>

<pallas_src>
import jax
import jax.numpy as jnp
from jax.experimental import pallas as pl
from jax.experimental.pallas import tpu as pltpu


def rnn_kernel(x_ref,       # (T*Bp, Ip)     time-major flattened input, zero-padded
               wih0_ref,    # (Ip, 2*Hp)     [W_ih0^T | 0]
               b0e_ref,     # (1, 2*Hp)      [b_ih0 + b_hh0 | b_ih1 + b_hh1]
               wcomb_ref,   # (2*Hp, 2*Hp)   [[W_hh0^T, W_ih1^T], [0, W_hh1^T]]
               b1_ref,      # (1, Hp)        b_ih1 + b_hh1
               wfc_ref,     # (1, Hp)        fc weight row
               bfc_ref,     # (1, 1)         fc bias
               o_ref,       # (Bp, 1)        output
               xproj_ref):  # VMEM scratch (T*Bp, 2*Hp)
    TB = x_ref.shape[0]
    Hp2 = wcomb_ref.shape[0]
    Hp = Hp2 // 2
    Bp = o_ref.shape[0]
    T = TB // Bp

    # Hoisted input projection: ONE MXU pass over all timesteps.
    #   lanes [0:Hp]   -> x_t @ W_ih0^T + (b_ih0 + b_hh0)
    #   lanes [Hp:2Hp] -> (b_ih1 + b_hh1)   (W_ih0-extension columns are zero)
    # Stored in VMEM scratch so the loop reads cheap static slices (low vreg pressure).
    xproj_ref[...] = (
        jnp.dot(x_ref[...], wih0_ref[...], preferred_element_type=jnp.float32)
        + b0e_ref[...])

    # Peeled t=0 (h0(-1)=h1(-1)=0):  hh(0) = [h0(0) | h1(-1)] = [tanh(xproj(0)) | 0]
    hh = jnp.concatenate(
        [jnp.tanh(xproj_ref[0:Bp, 0:Hp]),
         jnp.zeros((Bp, Hp), jnp.float32)], axis=-1)          # (Bp, 2*Hp)

    # Skewed steady state, fully unrolled (T static & small):
    #   hh(t) = tanh( hh(t-1) @ W_comb + [xproj(t) | b1] )  ->  [h0(t) | h1(t-1)]
    # One dependent matmul + one tanh per step; weights read from VMEM per-iteration.
    for t in range(1, T):
        pre = (jnp.dot(hh, wcomb_ref[...], preferred_element_type=jnp.float32)
               + xproj_ref[t * Bp:(t + 1) * Bp, :])
        hh = jnp.tanh(pre)

    # Epilogue: final layer-1 step  h1(T-1) = tanh(h0(T-1) @ W_ih1^T + h1(T-2) @ W_hh1^T + b1)
    # Uses only the right half of W_comb (lane-aligned static ref slice).
    pre1 = (jnp.dot(hh, wcomb_ref[:, Hp:], preferred_element_type=jnp.float32)
            + b1_ref[...])
    h1_last = jnp.tanh(pre1)                                  # (Bp, Hp)

    # fc on the last timestep: VPU multiply + lane reduction (no N=1 MXU matmul).
    o_ref[...] = jnp.sum(h1_last * wfc_ref[...], axis=-1, keepdims=True) + bfc_ref[...]


def _round_up(n, m):
    return ((n + m - 1) // m) * m


def prepare_params(params):
    """One-time parameter prep: pad / transpose / stack everything constant.

    Keep this OUT of the per-call path; pass the returned dict to rnn_model_forward.
    """
    f32 = jnp.float32
    H = params["w_hh0"].shape[0]
    I = params["w_ih0"].shape[1]
    Hp = _round_up(max(H, 128), 128)   # lane-dense hidden
    Ip = _round_up(max(I, 128), 128)   # lane-dense input

    # Extended input projection [W_ih0^T | 0]  (zero right half -> xproj lanes [Hp:2Hp] carry b1 only)
    wih0e = jnp.zeros((Ip, 2 * Hp), f32).at[:I, :H].set(params["w_ih0"].T.astype(f32))

    b0 = (params["b_ih0"] + params["b_hh0"]).astype(f32)
    b1 = (params["b_ih1"] + params["b_hh1"]).astype(f32)
    b0e = jnp.zeros((1, 2 * Hp), f32).at[0, :H].set(b0).at[0, Hp:Hp + H].set(b1)

    # Combined recurrent weight  [[W_hh0^T, W_ih1^T], [0, W_hh1^T]]  (padded blocks are zero,
    # so padded hidden lanes stay exactly 0 through the recurrence).
    wcomb = jnp.zeros((2 * Hp, 2 * Hp), f32)
    wcomb = wcomb.at[:H, :H].set(params["w_hh0"].T.astype(f32))
    wcomb = wcomb.at[:H, Hp:Hp + H].set(params["w_ih1"].T.astype(f32))
    wcomb = wcomb.at[Hp:Hp + H, Hp:Hp + H].set(params["w_hh1"].T.astype(f32))

    b1_p = jnp.zeros((1, Hp), f32).at[0, :H].set(b1)
    wfc_p = jnp.zeros((1, Hp), f32).at[0, :H].set(params["w_fc"][0].astype(f32))
    bfc_p = params["b_fc"].reshape(1, 1).astype(f32)

    return {"wih0e": wih0e, "b0e": b0e, "wcomb": wcomb,
            "b1": b1_p, "wfc": wfc_p, "bfc": bfc_p}


@jax.jit
def rnn_model_forward(x, prepped):
    """x: (B, T, I) float32 (batch_first, like the PyTorch module). Returns (B, 1)."""
    B, T, I = x.shape
    Ip = prepped["wih0e"].shape[0]
    Hp2 = prepped["wcomb"].shape[0]
    Bp = _round_up(max(B, 8), 8)       # sublane-aligned batch

    # Time-major, zero-padded, flattened to (T*Bp, Ip).  Tiny; fused under jit.
    x_tm = jnp.transpose(x, (1, 0, 2)).astype(jnp.float32)                    # (T, B, I)
    x_p = (jnp.zeros((T, Bp, Ip), jnp.float32)
           .at[:, :B, :I].set(x_tm)
           .reshape(T * Bp, Ip))

    vmem = pl.BlockSpec(memory_space=pltpu.MemorySpace.VMEM)
    out_p = pl.pallas_call(
        rnn_kernel,
        out_shape=jax.ShapeDtypeStruct((Bp, 1), jnp.float32),
        in_specs=[vmem] * 7,
        out_specs=vmem,
        scratch_shapes=[pltpu.VMEM((T * Bp, Hp2), jnp.float32)],
    )(x_p, prepped["wih0e"], prepped["b0e"], prepped["wcomb"],
      prepped["b1"], prepped["wfc"], prepped["bfc"])

    return out_p[:B]                                                           # (B, 1)


def init_params(key, input_size, hidden_size):
    """Deterministic init mirroring nn.RNN / nn.Linear shapes (uniform +/- 1/sqrt(H))."""
    ks = jax.random.split(key, 10)
    s = 1.0 / jnp.sqrt(hidden_size)
    u = lambda k, shape: jax.random.uniform(k, shape, jnp.float32, -s, s)
    return {
        "w_ih0": u(ks[0], (hidden_size, input_size)),
        "w_hh0": u(ks[1], (hidden_size, hidden_size)),
        "b_ih0": u(ks[2], (hidden_size,)),
        "b_hh0": u(ks[3], (hidden_size,)),
        "w_ih1": u(ks[4], (hidden_size, hidden_size)),
        "w_hh1": u(ks[5], (hidden_size, hidden_size)),
        "b_ih1": u(ks[6], (hidden_size,)),
        "b_hh1": u(ks[7], (hidden_size,)),
        "w_fc": u(ks[8], (1, hidden_size)),
        "b_fc": u(ks[9], (1,)),
    }


def reference_forward(x, p):
    """Pure-JAX reference of the PyTorch forward (for correctness check)."""
    B, T, _ = x.shape
    H = p["w_hh0"].shape[0]
    h0 = jnp.zeros((B, H), jnp.float32)
    h1 = jnp.zeros((B, H), jnp.float32)
    for t in range(T):
        xt = x[:, t, :]
        h0 = jnp.tanh(xt @ p["w_ih0"].T + p["b_ih0"] + h0 @ p["w_hh0"].T + p["b_hh0"])
        h1 = jnp.tanh(h0 @ p["w_ih1"].T + p["b_ih1"] + h1 @ p["w_hh1"].T + p["b_hh1"])
    return h1 @ p["w_fc"].T + p["b_fc"]


if __name__ == "__main__":
    B, T, I, H = 2, 8, 4, 20   # hidden_size is hardcoded to 20 in the module
    key = jax.random.PRNGKey(0)
    kx, kp = jax.random.split(key)
    x = jax.random.normal(kx, (B, T, I), jnp.float32)
    params = init_params(kp, I, H)

    prepped = prepare_params(params)           # one-time, off the per-call path
    out = rnn_model_forward(x, prepped)
    jax.block_until_ready(out)

    ref = reference_forward(x, params)
    assert out.shape == (B, 1), out.shape
    assert jnp.allclose(out, ref, atol=1e-5, rtol=1e-5), (out, ref)
    print("KERNEL_OK")
</pallas_src>

<mosaic_0001>
module attributes {stable_mosaic.version = 11 : i64} {
  func.func @rnn_kernel(%arg0: memref<64x128xf32, #tpu.memory_space<vmem>>, %arg1: memref<128x256xf32, #tpu.memory_space<vmem>>, %arg2: memref<1x256xf32, #tpu.memory_space<vmem>>, %arg3: memref<256x256xf32, #tpu.memory_space<vmem>>, %arg4: memref<1x128xf32, #tpu.memory_space<vmem>>, %arg5: memref<1x128xf32, #tpu.memory_space<vmem>>, %arg6: memref<1x1xf32, #tpu.memory_space<vmem>>, %arg7: memref<8x1xf32, #tpu.memory_space<vmem>>, %arg8: memref<64x256xf32, #tpu.memory_space<vmem>>) attributes {dimension_semantics = [], scalar_prefetch = 0 : i64, scratch_operands = 1 : i64, tpu.core_type = #tpu.core_type<tc>} {
    %c0 = arith.constant 0 : index
    %c0_0 = arith.constant 0 : index
    %0 = vector.load %arg0[%c0, %c0_0] : memref<64x128xf32, #tpu.memory_space<vmem>>, vector<64x128xf32>
    %c0_1 = arith.constant 0 : index
    %c0_2 = arith.constant 0 : index
    %1 = vector.load %arg1[%c0_1, %c0_2] : memref<128x256xf32, #tpu.memory_space<vmem>>, vector<128x256xf32>
    %cst = arith.constant dense<0.000000e+00> : vector<64x256xf32>
    %2 = tpu.matmul %0, %1, %cst {dimension_numbers = #tpu.dot_dimension_numbers<[1], [0], [0], [1], [0, 0, 1, 1], [], []>} : vector<64x128xf32>, vector<128x256xf32>, vector<64x256xf32> -> vector<64x256xf32>
    %c0_3 = arith.constant 0 : index
    %c0_4 = arith.constant 0 : index
    %3 = vector.load %arg2[%c0_3, %c0_4] : memref<1x256xf32, #tpu.memory_space<vmem>>, vector<1x256xf32>
    %4 = vector.broadcast %3 : vector<1x256xf32> to vector<64x256xf32>
    %5 = arith.addf %2, %4 : vector<64x256xf32>
    %c0_5 = arith.constant 0 : index
    %c0_6 = arith.constant 0 : index
    %6 = vector.load %arg8[%c0_5, %c0_6] : memref<64x256xf32, #tpu.memory_space<vmem>>, vector<64x256xf32>
    tpu.vector_store %arg8[%c0_5, %c0_6], %5 {strides = array<i32>} : memref<64x256xf32, #tpu.memory_space<vmem>>, vector<64x256xf32>,
    %c0_7 = arith.constant 0 : index
    %c0_8 = arith.constant 0 : index
    %7 = vector.load %arg8[%c0_7, %c0_8] : memref<64x256xf32, #tpu.memory_space<vmem>>, vector<8x128xf32>
    %8 = math.tanh %7 : vector<8x128xf32>
    %cst_9 = arith.constant 0.000000e+00 : f32
    %9 = vector.broadcast %cst_9 : f32 to vector<8x128xf32>
    %10 = tpu.concatenate %8, %9 in 1 : vector<8x128xf32>, vector<8x128xf32> -> vector<8x256xf32>
    %c0_10 = arith.constant 0 : index
    %c0_11 = arith.constant 0 : index
    %11 = vector.load %arg3[%c0_10, %c0_11] : memref<256x256xf32, #tpu.memory_space<vmem>>, vector<256x256xf32>
    %cst_12 = arith.constant dense<0.000000e+00> : vector<8x256xf32>
    %12 = tpu.matmul %10, %11, %cst_12 {dimension_numbers = #tpu.dot_dimension_numbers<[1], [0], [0], [1], [0, 0, 1, 1], [], []>} : vector<8x256xf32>, vector<256x256xf32>, vector<8x256xf32> -> vector<8x256xf32>
    %c8 = arith.constant 8 : index
    %c0_13 = arith.constant 0 : index
    %13 = vector.load %arg8[%c8, %c0_13] : memref<64x256xf32, #tpu.memory_space<vmem>>, vector<8x256xf32>
    %14 = arith.addf %12, %13 : vector<8x256xf32>
    %15 = math.tanh %14 : vector<8x256xf32>
    %c0_14 = arith.constant 0 : index
    %c0_15 = arith.constant 0 : index
    %16 = vector.load %arg3[%c0_14, %c0_15] : memref<256x256xf32, #tpu.memory_space<vmem>>, vector<256x256xf32>
    %cst_16 = arith.constant dense<0.000000e+00> : vector<8x256xf32>
    %17 = tpu.matmul %15, %16, %cst_16 {dimension_numbers = #tpu.dot_dimension_numbers<[1], [0], [0], [1], [0, 0, 1, 1], [], []>} : vector<8x256xf32>, vector<256x256xf32>, vector<8x256xf32> -> vector<8x256xf32>
    %c16 = arith.constant 16 : index
    %c0_17 = arith.constant 0 : index
    %18 = vector.load %arg8[%c16, %c0_17] : memref<64x256xf32, #tpu.memory_space<vmem>>, vector<8x256xf32>
    %19 = arith.addf %17, %18 : vector<8x256xf32>
    %20 = math.tanh %19 : vector<8x256xf32>
    %c0_18 = arith.constant 0 : index
    %c0_19 = arith.constant 0 : index
    %21 = vector.load %arg3[%c0_18, %c0_19] : memref<256x256xf32, #tpu.memory_space<vmem>>, vector<256x256xf32>
    %cst_20 = arith.constant dense<0.000000e+00> : vector<8x256xf32>
    %22 = tpu.matmul %20, %21, %cst_20 {dimension_numbers = #tpu.dot_dimension_numbers<[1], [0], [0], [1], [0, 0, 1, 1], [], []>} : vector<8x256xf32>, vector<256x256xf32>, vector<8x256xf32> -> vector<8x256xf32>
    %c24 = arith.constant 24 : index
    %c0_21 = arith.constant 0 : index
    %23 = vector.load %arg8[%c24, %c0_21] : memref<64x256xf32, #tpu.memory_space<vmem>>, vector<8x256xf32>
    %24 = arith.addf %22, %23 : vector<8x256xf32>
    %25 = math.tanh %24 : vector<8x256xf32>
    %c0_22 = arith.constant 0 : index
    %c0_23 = arith.constant 0 : index
    %26 = vector.load %arg3[%c0_22, %c0_23] : memref<256x256xf32, #tpu.memory_space<vmem>>, vector<256x256xf32>
    %cst_24 = arith.constant dense<0.000000e+00> : vector<8x256xf32>
    %27 = tpu.matmul %25, %26, %cst_24 {dimension_numbers = #tpu.dot_dimension_numbers<[1], [0], [0], [1], [0, 0, 1, 1], [], []>} : vector<8x256xf32>, vector<256x256xf32>, vector<8x256xf32> -> vector<8x256xf32>
    %c32 = arith.constant 32 : index
    %c0_25 = arith.constant 0 : index
    %28 = vector.load %arg8[%c32, %c0_25] : memref<64x256xf32, #tpu.memory_space<vmem>>, vector<8x256xf32>
    %29 = arith.addf %27, %28 : vector<8x256xf32>
    %30 = math.tanh %29 : vector<8x256xf32>
    %c0_26 = arith.constant 0 : index
    %c0_27 = arith.constant 0 : index
    %31 = vector.load %arg3[%c0_26, %c0_27] : memref<256x256xf32, #tpu.memory_space<vmem>>, vector<256x256xf32>
    %cst_28 = arith.constant dense<0.000000e+00> : vector<8x256xf32>
    %32 = tpu.matmul %30, %31, %cst_28 {dimension_numbers = #tpu.dot_dimension_numbers<[1], [0], [0], [1], [0, 0, 1, 1], [], []>} : vector<8x256xf32>, vector<256x256xf32>, vector<8x256xf32> -> vector<8x256xf32>
    %c40 = arith.constant 40 : index
    %c0_29 = arith.constant 0 : index
    %33 = vector.load %arg8[%c40, %c0_29] : memref<64x256xf32, #tpu.memory_space<vmem>>, vector<8x256xf32>
    %34 = arith.addf %32, %33 : vector<8x256xf32>
    %35 = math.tanh %34 : vector<8x256xf32>
    %c0_30 = arith.constant 0 : index
    %c0_31 = arith.constant 0 : index
    %36 = vector.load %arg3[%c0_30, %c0_31] : memref<256x256xf32, #tpu.memory_space<vmem>>, vector<256x256xf32>
    %cst_32 = arith.constant dense<0.000000e+00> : vector<8x256xf32>
    %37 = tpu.matmul %35, %36, %cst_32 {dimension_numbers = #tpu.dot_dimension_numbers<[1], [0], [0], [1], [0, 0, 1, 1], [], []>} : vector<8x256xf32>, vector<256x256xf32>, vector<8x256xf32> -> vector<8x256xf32>
    %c48 = arith.constant 48 : index
    %c0_33 = arith.constant 0 : index
    %38 = vector.load %arg8[%c48, %c0_33] : memref<64x256xf32, #tpu.memory_space<vmem>>, vector<8x256xf32>
    %39 = arith.addf %37, %38 : vector<8x256xf32>
    %40 = math.tanh %39 : vector<8x256xf32>
    %c0_34 = arith.constant 0 : index
    %c0_35 = arith.constant 0 : index
    %41 = vector.load %arg3[%c0_34, %c0_35] : memref<256x256xf32, #tpu.memory_space<vmem>>, vector<256x256xf32>
    %cst_36 = arith.constant dense<0.000000e+00> : vector<8x256xf32>
    %42 = tpu.matmul %40, %41, %cst_36 {dimension_numbers = #tpu.dot_dimension_numbers<[1], [0], [0], [1], [0, 0, 1, 1], [], []>} : vector<8x256xf32>, vector<256x256xf32>, vector<8x256xf32> -> vector<8x256xf32>
    %c56 = arith.constant 56 : index
    %c0_37 = arith.constant 0 : index
    %43 = vector.load %arg8[%c56, %c0_37] : memref<64x256xf32, #tpu.memory_space<vmem>>, vector<8x256xf32>
    %44 = arith.addf %42, %43 : vector<8x256xf32>
    %45 = math.tanh %44 : vector<8x256xf32>
    %c0_38 = arith.constant 0 : index
    %c128 = arith.constant 128 : index
    %46 = vector.load %arg3[%c0_38, %c128] : memref<256x256xf32, #tpu.memory_space<vmem>>, vector<256x128xf32>
    %cst_39 = arith.constant dense<0.000000e+00> : vector<8x128xf32>
    %47 = tpu.matmul %45, %46, %cst_39 {dimension_numbers = #tpu.dot_dimension_numbers<[1], [0], [0], [1], [0, 0, 1, 1], [], []>} : vector<8x256xf32>, vector<256x128xf32>, vector<8x128xf32> -> vector<8x128xf32>
    %c0_40 = arith.constant 0 : index
    %c0_41 = arith.constant 0 : index
    %48 = vector.load %arg4[%c0_40, %c0_41] : memref<1x128xf32, #tpu.memory_space<vmem>>, vector<1x128xf32>
    %49 = vector.broadcast %48 : vector<1x128xf32> to vector<8x128xf32>
    %50 = arith.addf %47, %49 : vector<8x128xf32>
    %51 = math.tanh %50 : vector<8x128xf32>
    %c0_42 = arith.constant 0 : index
    %c0_43 = arith.constant 0 : index
    %52 = vector.load %arg5[%c0_42, %c0_43] : memref<1x128xf32, #tpu.memory_space<vmem>>, vector<1x128xf32>
    %53 = vector.broadcast %52 : vector<1x128xf32> to vector<8x128xf32>
    %54 = arith.mulf %51, %53 : vector<8x128xf32>
    %cst_44 = arith.constant dense<0.000000e+00> : vector<8xf32>
    %55 = vector.multi_reduction <add>, %54, %cst_44 [1] : vector<8x128xf32> to vector<8xf32>
    %56 = vector.shape_cast %55 : vector<8xf32> to vector<8x1xf32>
    %c0_45 = arith.constant 0 : index
    %c0_46 = arith.constant 0 : index
    %57 = vector.load %arg6[%c0_45, %c0_46] : memref<1x1xf32, #tpu.memory_space<vmem>>, vector<1x1xf32>
    %58 = vector.broadcast %57 : vector<1x1xf32> to vector<8x1xf32>
    %59 = arith.addf %56, %58 : vector<8x1xf32>
    %c0_47 = arith.constant 0 : index
    %c0_48 = arith.constant 0 : index
    %60 = vector.load %arg7[%c0_47, %c0_48] : memref<8x1xf32, #tpu.memory_space<vmem>>, vector<8x1xf32>
    tpu.vector_store %arg7[%c0_47, %c0_48], %59 {strides = array<i32>} : memref<8x1xf32, #tpu.memory_space<vmem>>, vector<8x1xf32>,
    return
  }
}

</mosaic_0001>

<llo_original>
// kernel: rnn_model_forward.1
$region0: #{rnn_model_forward.1}
  #allocation0 [shape = 'u32[]', space=smem, size = 0x4, offset = 0x4, fixed_abs, tag = 'smem constant byte address 0x4 - core index']
  #allocation1 [shape = 'u32[72,128]{1,0:T(1,128)}', space=vmem, size = 0x9000, scoped, tag = 'internal scratch']
  #allocation2 [shape = 'f32[64,256]{1,0:T(8,128)}', space=vmem, size = 0x10000, scoped, tag = 'scratch operand']
  #allocation3 [shape = 'f32[1,1]{1,0:T(1,128)S(1)}', space=vmem, size = 0x200, scoped, tag = 'scoped memory for rnn_model_forward.1']
  %s0 = inlined_call_operand.vmem [shape: f32[64,128], index: 0, kind: input, shape index: {}]
  %s1 = inlined_call_operand.hbm [shape: f32[128,256], index: 1, kind: input, shape index: {}]
  %s2 = inlined_call_operand.vmem [shape: f32[1,256], index: 2, kind: input, shape index: {}]
  %s3 = inlined_call_operand.hbm [shape: f32[256,256], index: 3, kind: input, shape index: {}]
  %s4 = inlined_call_operand.vmem [shape: f32[1,128], index: 4, kind: input, shape index: {}]
  %s5 = inlined_call_operand.vmem [shape: f32[1,128], index: 5, kind: input, shape index: {}]
  %s6 = inlined_call_operand.<no memory space> [shape: f32[1,1], index: 6, kind: input, shape index: {}]
  %s7 = inlined_call_operand.vmem [shape: f32[8,1], index: 7, kind: output, shape index: {}]
  %s8 = sld [smem:[#allocation0]]
  $region46: #{rnn_model_forward.1} parent=0
    _
  %s10 = ssub.s32 1, %s8
  %s11 = scalar_select 0, %s10, %s8
  %v12 = vstv %s6
  %13 = vst [vmem:[#allocation3] sm:$0x1] %v12
  $region1: #{rnn_model_forward.1} parent=0
    #allocation4 [shape = 'u8[131072]{0}', space=vmem, size = 0x20000, scoped, tag = 'input window, operand 1, single buffered']
    #allocation5 [shape = 's32[1]{0}', space=sflag, size = 0x4, scoped, tag = 'scoped memory for rnn_model_forward.1']
    #allocation6 [shape = 'u8[262144]{0}', space=vmem, size = 0x40000, scoped, tag = 'input window, operand 3, single buffered']
    #allocation7 [shape = 's32[1]{0}', space=sflag, size = 0x4, scoped, tag = 'scoped memory for rnn_model_forward.1']
    %14 = vsyncpa [#allocation5], 0
    %15 = vsyncpa [#allocation7], 0
    // Predicated region
    $region2: #{rnn_model_forward.1} parent=1 // pred_check
      _
    $region3: #{rnn_model_forward.1} parent=1 // pred_check_branch
      %17 = sbr.rel (0) target = $region5
    $region4: #{rnn_model_forward.1} parent=1 // pred_region
      _
    $region5: #{rnn_model_forward.1} parent=1 // pred_fallthru
      _
    // Predicated region
    $region6: #{rnn_model_forward.1} parent=1 // pred_check
      _
    $region7: #{rnn_model_forward.1} parent=1 // pred_check_branch
      %19 = sbr.rel (0) target = $region9
    $region8: #{rnn_model_forward.1} parent=1 // pred_region
      %21 = vsyncadd [#allocation5], 0
      %s22 = sshll.u32 %s1, 4
      %s23 = int_to_ptr.hbm [resolvable:$true] %s22
      %s24 = sshll.u32 [#allocation4], 4
      %s25 = int_to_ptr.vmem [resolvable:$true] %s24
      %30 = dma.hbm_to_vmem [thread:$0]  %s23, 4096, %s25, [#allocation5], 256, 256, 16
    $region9: #{rnn_model_forward.1} parent=1 // pred_fallthru
      _
    // Predicated region
    $region10: #{rnn_model_forward.1} parent=1 // pred_check
      _
    $region11: #{rnn_model_forward.1} parent=1 // pred_check_branch
      %32 = sbr.rel (0) target = $region13
    $region12: #{rnn_model_forward.1} parent=1 // pred_region
      _
    $region13: #{rnn_model_forward.1} parent=1 // pred_fallthru
      _
    // Predicated region
    $region14: #{rnn_model_forward.1} parent=1 // pred_check
      _
    $region15: #{rnn_model_forward.1} parent=1 // pred_check_branch
      %34 = sbr.rel (0) target = $region17
    $region16: #{rnn_model_forward.1} parent=1 // pred_region
      %36 = vsyncadd [#allocation7], 0
      %s37 = sshll.u32 %s3, 4
      %s38 = int_to_ptr.hbm [resolvable:$true] %s37
      %s39 = sshll.u32 [#allocation6], 4
      %s40 = int_to_ptr.vmem [resolvable:$true] %s39
      %45 = dma.hbm_to_vmem [thread:$0]  %s38, 8192, %s40, [#allocation7], 256, 256, 16
    $region17: #{rnn_model_forward.1} parent=1 // pred_fallthru
      _
    // Predicated region
    $region18: #{rnn_model_forward.1} parent=1 // pred_check
      _
    $region19: #{rnn_model_forward.1} parent=1 // pred_check_branch
      %47 = sbr.rel (0) target = $region21
    $region20: #{rnn_model_forward.1} parent=1 // pred_region
      _
    $region21: #{rnn_model_forward.1} parent=1 // pred_fallthru
      _
    // Predicated region
    $region22: #{rnn_model_forward.1} parent=1 // pred_check
      _
    $region23: #{rnn_model_forward.1} parent=1 // pred_check_branch
      %49 = sbr.rel (0) target = $region25
    $region24: #{rnn_model_forward.1} parent=1 // pred_region
      _
    $region25: #{rnn_model_forward.1} parent=1 // pred_fallthru
      _
    // Predicated region
    $region26: #{rnn_model_forward.1} parent=1 // pred_check
      _
    $region27: #{rnn_model_forward.1} parent=1 // pred_check_branch
      %51 = sbr.rel (0) target = $region29
    $region28: #{rnn_model_forward.1} parent=1 // pred_region
      _
    $region29: #{rnn_model_forward.1} parent=1 // pred_fallthru
      _
    // Predicated region
    $region30: #{rnn_model_forward.1} parent=1 // pred_check
      _
    $region31: #{rnn_model_forward.1} parent=1 // pred_check_branch
      %53 = sbr.rel (0) target = $region33
    $region32: #{rnn_model_forward.1} parent=1 // pred_region
      %55 = dma.done [#allocation5], 4096
    $region33: #{rnn_model_forward.1} parent=1 // pred_fallthru
      _
    // Predicated region
    $region34: #{rnn_model_forward.1} parent=1 // pred_check
      _
    $region35: #{rnn_model_forward.1} parent=1 // pred_check_branch
      %57 = sbr.rel (0) target = $region37
    $region36: #{rnn_model_forward.1} parent=1 // pred_region
      %59 = dma.done [#allocation7], 8192
    $region37: #{rnn_model_forward.1} parent=1 // pred_fallthru
      _
    %v60 = vld [vmem:[%s0] sm:$0xff]
    %v61 = vld [vmem:[%s0 + $0x8] sm:$0xff]
    %v62 = vld [vmem:[%s0 + $0x10] sm:$0xff]
    %v63 = vld [vmem:[%s0 + $0x18] sm:$0xff]
    %v64 = vld [vmem:[%s0 + $0x20] sm:$0xff]
    %v65 = vld [vmem:[%s0 + $0x28] sm:$0xff]
    %v66 = vld [vmem:[%s0 + $0x30] sm:$0xff]
    %v67 = vld [vmem:[%s0 + $0x38] sm:$0xff]
    %v68 = vld [vmem:[#allocation4] sm:$0xff]
    %v69 = vld [vmem:[#allocation4 + $0x8] sm:$0xff]
    %v70 = vld [vmem:[#allocation4 + $0x10] sm:$0xff]
    %v71 = vld [vmem:[#allocation4 + $0x18] sm:$0xff]
    %v72 = vld [vmem:[#allocation4 + $0x20] sm:$0xff]
    %v73 = vld [vmem:[#allocation4 + $0x28] sm:$0xff]
    %v74 = vld [vmem:[#allocation4 + $0x30] sm:$0xff]
    %v75 = vld [vmem:[#allocation4 + $0x38] sm:$0xff]
    %v76 = vld [vmem:[#allocation4 + $0x40] sm:$0xff]
    %v77 = vld [vmem:[#allocation4 + $0x48] sm:$0xff]
    %v78 = vld [vmem:[#allocation4 + $0x50] sm:$0xff]
    %v79 = vld [vmem:[#allocation4 + $0x58] sm:$0xff]
    %v80 = vld [vmem:[#allocation4 + $0x60] sm:$0xff]
    %v81 = vld [vmem:[#allocation4 + $0x68] sm:$0xff]
    %v82 = vld [vmem:[#allocation4 + $0x70] sm:$0xff]
    %v83 = vld [vmem:[#allocation4 + $0x78] sm:$0xff]
    %v84 = vld [vmem:[#allocation4 + $0x80] sm:$0xff]
    %v85 = vld [vmem:[#allocation4 + $0x88] sm:$0xff]
    %v86 = vld [vmem:[#allocation4 + $0x90] sm:$0xff]
    %v87 = vld [vmem:[#allocation4 + $0x98] sm:$0xff]
    %v88 = vld [vmem:[#allocation4 + $0xa0] sm:$0xff]
    %v89 = vld [vmem:[#allocation4 + $0xa8] sm:$0xff]
    %v90 = vld [vmem:[#allocation4 + $0xb0] sm:$0xff]
    %v91 = vld [vmem:[#allocation4 + $0xb8] sm:$0xff]
    %v92 = vld [vmem:[#allocation4 + $0xc0] sm:$0xff]
    %v93 = vld [vmem:[#allocation4 + $0xc8] sm:$0xff]
    %v94 = vld [vmem:[#allocation4 + $0xd0] sm:$0xff]
    %v95 = vld [vmem:[#allocation4 + $0xd8] sm:$0xff]
    %v96 = vld [vmem:[#allocation4 + $0xe0] sm:$0xff]
    %v97 = vld [vmem:[#allocation4 + $0xe8] sm:$0xff]
    %v98 = vld [vmem:[#allocation4 + $0xf0] sm:$0xff]
    %v99 = vld [vmem:[#allocation4 + $0xf8] sm:$0xff]
    %v100 = vld [vmem:[%s2] sm:$0x3]
    %v102 = vperm.slane %v100, 0
    %v103 = vperm.slane %v100, 1
    %106 = vmatpush.msra.mxu0 %v98
    %107 = vmatpush.msra.mxu0 %v96
    %108 = vmatpush.msra.mxu0 %v94
    %109 = vmatpush.msra.mxu0 %v92
    %110 = vmatpush.msra.mxu0 %v90
    %111 = vmatpush.msra.mxu0 %v88
    %112 = vmatpush.msra.mxu0 %v86
    %113 = vmatpush.msra.mxu0 %v84
    %114 = vmatpush.msra.mxu0 %v82
    %115 = vmatpush.msra.mxu0 %v80
    %116 = vmatpush.msra.mxu0 %v78
    %117 = vmatpush.msra.mxu0 %v76
    %118 = vmatpush.msra.mxu0 %v74
    %119 = vmatpush.msra.mxu0 %v72
    %120 = vmatpush.msra.mxu0 %v70
    %121 = vmatpush.msra.mxu0 %v68
    %122 = vmatmul.f32.gmra.mxu0 %v60
    %v123 = vpop.f32.mrf.mxu0
    %v124 = vadd.f32 %v102, %v123
    %125 = vmatmul.f32.gmra.mxu0 %v61
    %v126 = vpop.f32.mrf.mxu0
    %v127 = vadd.f32 %v102, %v126
    %128 = vmatmul.f32.gmra.mxu0 %v62
    %v129 = vpop.f32.mrf.mxu0
    %v130 = vadd.f32 %v102, %v129
    %131 = vmatmul.f32.gmra.mxu0 %v63
    %v132 = vpop.f32.mrf.mxu0
    %v133 = vadd.f32 %v102, %v132
    %134 = vmatmul.f32.gmra.mxu0 %v64
    %v135 = vpop.f32.mrf.mxu0
    %v136 = vadd.f32 %v102, %v135
    %137 = vmatmul.f32.gmra.mxu0 %v65
    %v138 = vpop.f32.mrf.mxu0
    %v139 = vadd.f32 %v102, %v138
    %140 = vmatmul.f32.gmra.mxu0 %v66
    %v141 = vpop.f32.mrf.mxu0
    %v142 = vadd.f32 %v102, %v141
    %143 = vmatmul.f32.gmra.mxu0 %v67
    %v144 = vpop.f32.mrf.mxu0
    %v145 = vadd.f32 %v102, %v144
    %146 = vdwg.mxu0
    %147 = vmatpush.msra.mxu0 %v99
    %148 = vmatpush.msra.mxu0 %v97
    %149 = vmatpush.msra.mxu0 %v95
    %150 = vmatpush.msra.mxu0 %v93
    %151 = vmatpush.msra.mxu0 %v91
    %152 = vmatpush.msra.mxu0 %v89
    %153 = vmatpush.msra.mxu0 %v87
    %154 = vmatpush.msra.mxu0 %v85
    %155 = vmatpush.msra.mxu0 %v83
    %156 = vmatpush.msra.mxu0 %v81
    %157 = vmatpush.msra.mxu0 %v79
    %158 = vmatpush.msra.mxu0 %v77
    %159 = vmatpush.msra.mxu0 %v75
    %160 = vmatpush.msra.mxu0 %v73
    %161 = vmatpush.msra.mxu0 %v71
    %162 = vmatpush.msra.mxu0 %v69
    %163 = vmatmul.f32.gmra.mxu0 %v60
    %v164 = vpop.f32.mrf.mxu0
    %v165 = vadd.f32 %v103, %v164
    %166 = vmatmul.f32.gmra.mxu0 %v61
    %v167 = vpop.f32.mrf.mxu0
    %v168 = vadd.f32 %v103, %v167
    %169 = vmatmul.f32.gmra.mxu0 %v62
    %v170 = vpop.f32.mrf.mxu0
    %v171 = vadd.f32 %v103, %v170
    %172 = vmatmul.f32.gmra.mxu0 %v63
    %v173 = vpop.f32.mrf.mxu0
    %v174 = vadd.f32 %v103, %v173
    %175 = vmatmul.f32.gmra.mxu0 %v64
    %v176 = vpop.f32.mrf.mxu0
    %v177 = vadd.f32 %v103, %v176
    %178 = vmatmul.f32.gmra.mxu0 %v65
    %v179 = vpop.f32.mrf.mxu0
    %v180 = vadd.f32 %v103, %v179
    %181 = vmatmul.f32.gmra.mxu0 %v66
    %v182 = vpop.f32.mrf.mxu0
    %v183 = vadd.f32 %v103, %v182
    %184 = vmatmul.f32.gmra.mxu0 %v67
    %v185 = vpop.f32.mrf.mxu0
    %v186 = vadd.f32 %v103, %v185
    %187 = vdwg.mxu0
    %188 = vst [vmem:[#allocation2] sm:$0xff] %v124
    %189 = vst [vmem:[#allocation2 + $0x8] sm:$0xff] %v165
    %190 = vst [vmem:[#allocation2 + $0x10] sm:$0xff] %v127
    %191 = vst [vmem:[#allocation2 + $0x18] sm:$0xff] %v168
    %192 = vst [vmem:[#allocation2 + $0x20] sm:$0xff] %v130
    %193 = vst [vmem:[#allocation2 + $0x28] sm:$0xff] %v171
    %194 = vst [vmem:[#allocation2 + $0x30] sm:$0xff] %v133
    %195 = vst [vmem:[#allocation2 + $0x38] sm:$0xff] %v174
    %196 = vst [vmem:[#allocation2 + $0x40] sm:$0xff] %v136
    %197 = vst [vmem:[#allocation2 + $0x48] sm:$0xff] %v177
    %198 = vst [vmem:[#allocation2 + $0x50] sm:$0xff] %v139
    %199 = vst [vmem:[#allocation2 + $0x58] sm:$0xff] %v180
    %200 = vst [vmem:[#allocation2 + $0x60] sm:$0xff] %v142
    %201 = vst [vmem:[#allocation2 + $0x68] sm:$0xff] %v183
    %202 = vst [vmem:[#allocation2 + $0x70] sm:$0xff] %v145
    %203 = vst [vmem:[#allocation2 + $0x78] sm:$0xff] %v186
    %v204 = vld [vmem:[#allocation2] sm:$0xff]
    %v205 = vtanh.pop %v204
    %v206 = vld [vmem:[#allocation6] sm:$0xff]
    %v207 = vld [vmem:[#allocation6 + $0x8] sm:$0xff]
    %v208 = vld [vmem:[#allocation6 + $0x10] sm:$0xff]
    %v209 = vld [vmem:[#allocation6 + $0x18] sm:$0xff]
    %v210 = vld [vmem:[#allocation6 + $0x20] sm:$0xff]
    %v211 = vld [vmem:[#allocation6 + $0x28] sm:$0xff]
    %v212 = vld [vmem:[#allocation6 + $0x30] sm:$0xff]
    %v213 = vld [vmem:[#allocation6 + $0x38] sm:$0xff]
    %v214 = vld [vmem:[#allocation6 + $0x40] sm:$0xff]
    %v215 = vld [vmem:[#allocation6 + $0x48] sm:$0xff]
    %v216 = vld [vmem:[#allocation6 + $0x50] sm:$0xff]
    %v217 = vld [vmem:[#allocation6 + $0x58] sm:$0xff]
    %v218 = vld [vmem:[#allocation6 + $0x60] sm:$0xff]
    %v219 = vld [vmem:[#allocation6 + $0x68] sm:$0xff]
    %v220 = vld [vmem:[#allocation6 + $0x70] sm:$0xff]
    %v221 = vld [vmem:[#allocation6 + $0x78] sm:$0xff]
    %v222 = vld [vmem:[#allocation6 + $0x80] sm:$0xff]
    %v223 = vld [vmem:[#allocation6 + $0x88] sm:$0xff]
    %v224 = vld [vmem:[#allocation6 + $0x90] sm:$0xff]
    %v225 = vld [vmem:[#allocation6 + $0x98] sm:$0xff]
    %v226 = vld [vmem:[#allocation6 + $0xa0] sm:$0xff]
    %v227 = vld [vmem:[#allocation6 + $0xa8] sm:$0xff]
    %v228 = vld [vmem:[#allocation6 + $0xb0] sm:$0xff]
    %v229 = vld [vmem:[#allocation6 + $0xb8] sm:$0xff]
    %v230 = vld [vmem:[#allocation6 + $0xc0] sm:$0xff]
    %v231 = vld [vmem:[#allocation6 + $0xc8] sm:$0xff]
    %v232 = vld [vmem:[#allocation6 + $0xd0] sm:$0xff]
    %v233 = vld [vmem:[#allocation6 + $0xd8] sm:$0xff]
    %v234 = vld [vmem:[#allocation6 + $0xe0] sm:$0xff]
    %v235 = vld [vmem:[#allocation6 + $0xe8] sm:$0xff]
    %v236 = vld [vmem:[#allocation6 + $0xf0] sm:$0xff]
    %v237 = vld [vmem:[#allocation6 + $0xf8] sm:$0xff]
    %v238 = vld [vmem:[#allocation6 + $0x100] sm:$0xff]
    %v239 = vld [vmem:[#allocation6 + $0x108] sm:$0xff]
    %v240 = vld [vmem:[#allocation6 + $0x110] sm:$0xff]
    %v241 = vld [vmem:[#allocation6 + $0x118] sm:$0xff]
    %v242 = vld [vmem:[#allocation6 + $0x120] sm:$0xff]
    %v243 = vld [vmem:[#allocation6 + $0x128] sm:$0xff]
    %v244 = vld [vmem:[#allocation6 + $0x130] sm:$0xff]
    %v245 = vld [vmem:[#allocation6 + $0x138] sm:$0xff]
    %v246 = vld [vmem:[#allocation6 + $0x140] sm:$0xff]
    %v247 = vld [vmem:[#allocation6 + $0x148] sm:$0xff]
    %v248 = vld [vmem:[#allocation6 + $0x150] sm:$0xff]
    %v249 = vld [vmem:[#allocation6 + $0x158] sm:$0xff]
    %v250 = vld [vmem:[#allocation6 + $0x160] sm:$0xff]
    %v251 = vld [vmem:[#allocation6 + $0x168] sm:$0xff]
    %v252 = vld [vmem:[#allocation6 + $0x170] sm:$0xff]
    %v253 = vld [vmem:[#allocation6 + $0x178] sm:$0xff]
    %v254 = vld [vmem:[#allocation6 + $0x180] sm:$0xff]
    %v255 = vld [vmem:[#allocation6 + $0x188] sm:$0xff]
    %v256 = vld [vmem:[#allocation6 + $0x190] sm:$0xff]
    %v257 = vld [vmem:[#allocation6 + $0x198] sm:$0xff]
    %v258 = vld [vmem:[#allocation6 + $0x1a0] sm:$0xff]
    %v259 = vld [vmem:[#allocation6 + $0x1a8] sm:$0xff]
    %v260 = vld [vmem:[#allocation6 + $0x1b0] sm:$0xff]
    %v261 = vld [vmem:[#allocation6 + $0x1b8] sm:$0xff]
    %v262 = vld [vmem:[#allocation6 + $0x1c0] sm:$0xff]
    %v263 = vld [vmem:[#allocation6 + $0x1c8] sm:$0xff]
    %v264 = vld [vmem:[#allocation6 + $0x1d0] sm:$0xff]
    %v265 = vld [vmem:[#allocation6 + $0x1d8] sm:$0xff]
    %v266 = vld [vmem:[#allocation6 + $0x1e0] sm:$0xff]
    %v267 = vld [vmem:[#allocation6 + $0x1e8] sm:$0xff]
    %v268 = vld [vmem:[#allocation6 + $0x1f0] sm:$0xff]
    %v269 = vld [vmem:[#allocation6 + $0x1f8] sm:$0xff]
    %v270 = vld [vmem:[#allocation2 + $0x10] sm:$0xff]
    %v271 = vld [vmem:[#allocation2 + $0x18] sm:$0xff]
    %272 = vmatpush.msra.mxu0 %v236
    %273 = vmatpush.msra.mxu0 %v234
    %274 = vmatpush.msra.mxu0 %v232
    %275 = vmatpush.msra.mxu0 %v230
    %276 = vmatpush.msra.mxu0 %v228
    %277 = vmatpush.msra.mxu0 %v226
    %278 = vmatpush.msra.mxu0 %v224
    %279 = vmatpush.msra.mxu0 %v222
    %280 = vmatpush.msra.mxu0 %v220
    %281 = vmatpush.msra.mxu0 %v218
    %282 = vmatpush.msra.mxu0 %v216
    %283 = vmatpush.msra.mxu0 %v214
    %284 = vmatpush.msra.mxu0 %v212
    %285 = vmatpush.msra.mxu0 %v210
    %286 = vmatpush.msra.mxu0 %v208
    %287 = vmatpush.msra.mxu0 %v206
    %288 = vmatmul.f32.gmra.mxu0 %v205
    %v289 = vpop.f32.mrf.mxu0
    %v290 = vadd.f32 %v270, %v289
    %291 = vdwg.mxu0
    %292 = vmatpush.msra.mxu0 %v268
    %293 = vmatpush.msra.mxu0 %v266
    %294 = vmatpush.msra.mxu0 %v264
    %295 = vmatpush.msra.mxu0 %v262
    %296 = vmatpush.msra.mxu0 %v260
    %297 = vmatpush.msra.mxu0 %v258
    %298 = vmatpush.msra.mxu0 %v256
    %299 = vmatpush.msra.mxu0 %v254
    %300 = vmatpush.msra.mxu0 %v252
    %301 = vmatpush.msra.mxu0 %v250
    %302 = vmatpush.msra.mxu0 %v248
    %303 = vmatpush.msra.mxu0 %v246
    %304 = vmatpush.msra.mxu0 %v244
    %305 = vmatpush.msra.mxu0 %v242
    %306 = vmatpush.msra.mxu0 %v240
    %307 = vmatpush.msra.mxu0 %v238
    %308 = vmatmul.f32.gmra.mxu0 0.0
    %v309 = vpop.f32.mrf.mxu0
    %v310 = vadd.f32 %v290, %v309
    %311 = vdwg.mxu0
    %312 = vmatpush.msra.mxu0 %v237
    %313 = vmatpush.msra.mxu0 %v235
    %314 = vmatpush.msra.mxu0 %v233
    %315 = vmatpush.msra.mxu0 %v231
    %316 = vmatpush.msra.mxu0 %v229
    %317 = vmatpush.msra.mxu0 %v227
    %318 = vmatpush.msra.mxu0 %v225
    %319 = vmatpush.msra.mxu0 %v223
    %320 = vmatpush.msra.mxu0 %v221
    %321 = vmatpush.msra.mxu0 %v219
    %322 = vmatpush.msra.mxu0 %v217
    %323 = vmatpush.msra.mxu0 %v215
    %324 = vmatpush.msra.mxu0 %v213
    %325 = vmatpush.msra.mxu0 %v211
    %326 = vmatpush.msra.mxu0 %v209
    %327 = vmatpush.msra.mxu0 %v207
    %328 = vmatmul.f32.gmra.mxu0 %v205
    %v329 = vpop.f32.mrf.mxu0
    %v330 = vadd.f32 %v271, %v329
    %331 = vdwg.mxu0
    %332 = vmatpush.msra.mxu0 %v269
    %333 = vmatpush.msra.mxu0 %v267
    %334 = vmatpush.msra.mxu0 %v265
    %335 = vmatpush.msra.mxu0 %v263
    %336 = vmatpush.msra.mxu0 %v261
    %337 = vmatpush.msra.mxu0 %v259
    %338 = vmatpush.msra.mxu0 %v257
    %339 = vmatpush.msra.mxu0 %v255
    %340 = vmatpush.msra.mxu0 %v253
    %341 = vmatpush.msra.mxu0 %v251
    %342 = vmatpush.msra.mxu0 %v249
    %343 = vmatpush.msra.mxu0 %v247
    %344 = vmatpush.msra.mxu0 %v245
    %345 = vmatpush.msra.mxu0 %v243
    %346 = vmatpush.msra.mxu0 %v241
    %347 = vmatpush.msra.mxu0 %v239
    %348 = vmatmul.f32.gmra.mxu0 0.0
    %v349 = vpop.f32.mrf.mxu0
    %v350 = vadd.f32 %v330, %v349
    %351 = vdwg.mxu0
    %v352 = vtanh.pop %v310
    %v353 = vtanh.pop %v350
    %v354 = vld [vmem:[#allocation2 + $0x20] sm:$0xff]
    %v355 = vld [vmem:[#allocation2 + $0x28] sm:$0xff]
    %356 = vmatpush.msra.mxu0 %v236
    %357 = vmatpush.msra.mxu0 %v234
    %358 = vmatpush.msra.mxu0 %v232
    %359 = vmatpush.msra.mxu0 %v230
    %360 = vmatpush.msra.mxu0 %v228
    %361 = vmatpush.msra.mxu0 %v226
    %362 = vmatpush.msra.mxu0 %v224
    %363 = vmatpush.msra.mxu0 %v222
    %364 = vmatpush.msra.mxu0 %v220
    %365 = vmatpush.msra.mxu0 %v218
    %366 = vmatpush.msra.mxu0 %v216
    %367 = vmatpush.msra.mxu0 %v214
    %368 = vmatpush.msra.mxu0 %v212
    %369 = vmatpush.msra.mxu0 %v210
    %370 = vmatpush.msra.mxu0 %v208
    %371 = vmatpush.msra.mxu0 %v206
    %372 = vmatmul.f32.gmra.mxu0 %v352
    %v373 = vpop.f32.mrf.mxu0
    %v374 = vadd.f32 %v354, %v373
    %375 = vdwg.mxu0
    %376 = vmatpush.msra.mxu0 %v268
    %377 = vmatpush.msra.mxu0 %v266
    %378 = vmatpush.msra.mxu0 %v264
    %379 = vmatpush.msra.mxu0 %v262
    %380 = vmatpush.msra.mxu0 %v260
    %381 = vmatpush.msra.mxu0 %v258
    %382 = vmatpush.msra.mxu0 %v256
    %383 = vmatpush.msra.mxu0 %v254
    %384 = vmatpush.msra.mxu0 %v252
    %385 = vmatpush.msra.mxu0 %v250
    %386 = vmatpush.msra.mxu0 %v248
    %387 = vmatpush.msra.mxu0 %v246
    %388 = vmatpush.msra.mxu0 %v244
    %389 = vmatpush.msra.mxu0 %v242
    %390 = vmatpush.msra.mxu0 %v240
    %391 = vmatpush.msra.mxu0 %v238
    %392 = vmatmul.f32.gmra.mxu0 %v353
    %v393 = vpop.f32.mrf.mxu0
    %v394 = vadd.f32 %v374, %v393
    %395 = vdwg.mxu0
    %396 = vmatpush.msra.mxu0 %v237
    %397 = vmatpush.msra.mxu0 %v235
    %398 = vmatpush.msra.mxu0 %v233
    %399 = vmatpush.msra.mxu0 %v231
    %400 = vmatpush.msra.mxu0 %v229
    %401 = vmatpush.msra.mxu0 %v227
    %402 = vmatpush.msra.mxu0 %v225
    %403 = vmatpush.msra.mxu0 %v223
    %404 = vmatpush.msra.mxu0 %v221
    %405 = vmatpush.msra.mxu0 %v219
    %406 = vmatpush.msra.mxu0 %v217
    %407 = vmatpush.msra.mxu0 %v215
    %408 = vmatpush.msra.mxu0 %v213
    %409 = vmatpush.msra.mxu0 %v211
    %410 = vmatpush.msra.mxu0 %v209
    %411 = vmatpush.msra.mxu0 %v207
    %412 = vmatmul.f32.gmra.mxu0 %v352
    %v413 = vpop.f32.mrf.mxu0
    %v414 = vadd.f32 %v355, %v413
    %415 = vdwg.mxu0
    %416 = vmatpush.msra.mxu0 %v269
    %417 = vmatpush.msra.mxu0 %v267
    %418 = vmatpush.msra.mxu0 %v265
    %419 = vmatpush.msra.mxu0 %v263
    %420 = vmatpush.msra.mxu0 %v261
    %421 = vmatpush.msra.mxu0 %v259
    %422 = vmatpush.msra.mxu0 %v257
    %423 = vmatpush.msra.mxu0 %v255
    %424 = vmatpush.msra.mxu0 %v253
    %425 = vmatpush.msra.mxu0 %v251
    %426 = vmatpush.msra.mxu0 %v249
    %427 = vmatpush.msra.mxu0 %v247
    %428 = vmatpush.msra.mxu0 %v245
    %429 = vmatpush.msra.mxu0 %v243
    %430 = vmatpush.msra.mxu0 %v241
    %431 = vmatpush.msra.mxu0 %v239
    %432 = vmatmul.f32.gmra.mxu0 %v353
    %v433 = vpop.f32.mrf.mxu0
    %v434 = vadd.f32 %v414, %v433
    %435 = vdwg.mxu0
    %v436 = vtanh.pop %v394
    %v437 = vtanh.pop %v434
    %v438 = vld [vmem:[#allocation2 + $0x30] sm:$0xff]
    %v439 = vld [vmem:[#allocation2 + $0x38] sm:$0xff]
    %440 = vmatpush.msra.mxu0 %v236
    %441 = vmatpush.msra.mxu0 %v234
    %442 = vmatpush.msra.mxu0 %v232
    %443 = vmatpush.msra.mxu0 %v230
    %444 = vmatpush.msra.mxu0 %v228
    %445 = vmatpush.msra.mxu0 %v226
    %446 = vmatpush.msra.mxu0 %v224
    %447 = vmatpush.msra.mxu0 %v222
    %448 = vmatpush.msra.mxu0 %v220
    %449 = vmatpush.msra.mxu0 %v218
    %450 = vmatpush.msra.mxu0 %v216
    %451 = vmatpush.msra.mxu0 %v214
    %452 = vmatpush.msra.mxu0 %v212
    %453 = vmatpush.msra.mxu0 %v210
    %454 = vmatpush.msra.mxu0 %v208
    %455 = vmatpush.msra.mxu0 %v206
    %456 = vmatmul.f32.gmra.mxu0 %v436
    %v457 = vpop.f32.mrf.mxu0
    %v458 = vadd.f32 %v438, %v457
    %459 = vdwg.mxu0
    %460 = vmatpush.msra.mxu0 %v268
    %461 = vmatpush.msra.mxu0 %v266
    %462 = vmatpush.msra.mxu0 %v264
    %463 = vmatpush.msra.mxu0 %v262
    %464 = vmatpush.msra.mxu0 %v260
    %465 = vmatpush.msra.mxu0 %v258
    %466 = vmatpush.msra.mxu0 %v256
    %467 = vmatpush.msra.mxu0 %v254
    %468 = vmatpush.msra.mxu0 %v252
    %469 = vmatpush.msra.mxu0 %v250
    %470 = vmatpush.msra.mxu0 %v248
    %471 = vmatpush.msra.mxu0 %v246
    %472 = vmatpush.msra.mxu0 %v244
    %473 = vmatpush.msra.mxu0 %v242
    %474 = vmatpush.msra.mxu0 %v240
    %475 = vmatpush.msra.mxu0 %v238
    %476 = vmatmul.f32.gmra.mxu0 %v437
    %v477 = vpop.f32.mrf.mxu0
    %v478 = vadd.f32 %v458, %v477
    %479 = vdwg.mxu0
    %480 = vmatpush.msra.mxu0 %v237
    %481 = vmatpush.msra.mxu0 %v235
    %482 = vmatpush.msra.mxu0 %v233
    %483 = vmatpush.msra.mxu0 %v231
    %484 = vmatpush.msra.mxu0 %v229
    %485 = vmatpush.msra.mxu0 %v227
    %486 = vmatpush.msra.mxu0 %v225
    %487 = vmatpush.msra.mxu0 %v223
    %488 = vmatpush.msra.mxu0 %v221
    %489 = vmatpush.msra.mxu0 %v219
    %490 = vmatpush.msra.mxu0 %v217
    %491 = vmatpush.msra.mxu0 %v215
    %492 = vmatpush.msra.mxu0 %v213
    %493 = vmatpush.msra.mxu0 %v211
    %494 = vmatpush.msra.mxu0 %v209
    %495 = vmatpush.msra.mxu0 %v207
    %496 = vmatmul.f32.gmra.mxu0 %v436
    %v497 = vpop.f32.mrf.mxu0
    %v498 = vadd.f32 %v439, %v497
    %499 = vdwg.mxu0
    %500 = vmatpush.msra.mxu0 %v269
    %501 = vmatpush.msra.mxu0 %v267
    %502 = vmatpush.msra.mxu0 %v265
    %503 = vmatpush.msra.mxu0 %v263
    %504 = vmatpush.msra.mxu0 %v261
    %505 = vmatpush.msra.mxu0 %v259
    %506 = vmatpush.msra.mxu0 %v257
    %507 = vmatpush.msra.mxu0 %v255
    %508 = vmatpush.msra.mxu0 %v253
    %509 = vmatpush.msra.mxu0 %v251
    %510 = vmatpush.msra.mxu0 %v249
    %511 = vmatpush.msra.mxu0 %v247
    %512 = vmatpush.msra.mxu0 %v245
    %513 = vmatpush.msra.mxu0 %v243
    %514 = vmatpush.msra.mxu0 %v241
    %515 = vmatpush.msra.mxu0 %v239
    %516 = vmatmul.f32.gmra.mxu0 %v437
    %v517 = vpop.f32.mrf.mxu0
    %v518 = vadd.f32 %v498, %v517
    %519 = vdwg.mxu0
    %v520 = vtanh.pop %v478
    %v521 = vtanh.pop %v518
    %v522 = vld [vmem:[#allocation2 + $0x40] sm:$0xff]
    %v523 = vld [vmem:[#allocation2 + $0x48] sm:$0xff]
    %524 = vmatpush.msra.mxu0 %v236
    %525 = vmatpush.msra.mxu0 %v234
    %526 = vmatpush.msra.mxu0 %v232
    %527 = vmatpush.msra.mxu0 %v230
    %528 = vmatpush.msra.mxu0 %v228
    %529 = vmatpush.msra.mxu0 %v226
    %530 = vmatpush.msra.mxu0 %v224
    %531 = vmatpush.msra.mxu0 %v222
    %532 = vmatpush.msra.mxu0 %v220
    %533 = vmatpush.msra.mxu0 %v218
    %534 = vmatpush.msra.mxu0 %v216
    %535 = vmatpush.msra.mxu0 %v214
    %536 = vmatpush.msra.mxu0 %v212
    %537 = vmatpush.msra.mxu0 %v210
    %538 = vmatpush.msra.mxu0 %v208
    %539 = vmatpush.msra.mxu0 %v206
    %540 = vmatmul.f32.gmra.mxu0 %v520
    %v541 = vpop.f32.mrf.mxu0
    %v542 = vadd.f32 %v522, %v541
    %543 = vdwg.mxu0
    %544 = vmatpush.msra.mxu0 %v268
    %545 = vmatpush.msra.mxu0 %v266
    %546 = vmatpush.msra.mxu0 %v264
    %547 = vmatpush.msra.mxu0 %v262
    %548 = vmatpush.msra.mxu0 %v260
    %549 = vmatpush.msra.mxu0 %v258
    %550 = vmatpush.msra.mxu0 %v256
    %551 = vmatpush.msra.mxu0 %v254
    %552 = vmatpush.msra.mxu0 %v252
    %553 = vmatpush.msra.mxu0 %v250
    %554 = vmatpush.msra.mxu0 %v248
    %555 = vmatpush.msra.mxu0 %v246
    %556 = vmatpush.msra.mxu0 %v244
    %557 = vmatpush.msra.mxu0 %v242
    %558 = vmatpush.msra.mxu0 %v240
    %559 = vmatpush.msra.mxu0 %v238
    %560 = vmatmul.f32.gmra.mxu0 %v521
    %v561 = vpop.f32.mrf.mxu0
    %v562 = vadd.f32 %v542, %v561
    %563 = vdwg.mxu0
    %564 = vmatpush.msra.mxu0 %v237
    %565 = vmatpush.msra.mxu0 %v235
    %566 = vmatpush.msra.mxu0 %v233
    %567 = vmatpush.msra.mxu0 %v231
    %568 = vmatpush.msra.mxu0 %v229
    %569 = vmatpush.msra.mxu0 %v227
    %570 = vmatpush.msra.mxu0 %v225
    %571 = vmatpush.msra.mxu0 %v223
    %572 = vmatpush.msra.mxu0 %v221
    %573 = vmatpush.msra.mxu0 %v219
    %574 = vmatpush.msra.mxu0 %v217
    %575 = vmatpush.msra.mxu0 %v215
    %576 = vmatpush.msra.mxu0 %v213
    %577 = vmatpush.msra.mxu0 %v211
    %578 = vmatpush.msra.mxu0 %v209
    %579 = vmatpush.msra.mxu0 %v207
    %580 = vmatmul.f32.gmra.mxu0 %v520
    %v581 = vpop.f32.mrf.mxu0
    %v582 = vadd.f32 %v523, %v581
    %583 = vdwg.mxu0
    %584 = vmatpush.msra.mxu0 %v269
    %585 = vmatpush.msra.mxu0 %v267
    %586 = vmatpush.msra.mxu0 %v265
    %587 = vmatpush.msra.mxu0 %v263
    %588 = vmatpush.msra.mxu0 %v261
    %589 = vmatpush.msra.mxu0 %v259
    %590 = vmatpush.msra.mxu0 %v257
    %591 = vmatpush.msra.mxu0 %v255
    %592 = vmatpush.msra.mxu0 %v253
    %593 = vmatpush.msra.mxu0 %v251
    %594 = vmatpush.msra.mxu0 %v249
    %595 = vmatpush.msra.mxu0 %v247
    %596 = vmatpush.msra.mxu0 %v245
    %597 = vmatpush.msra.mxu0 %v243
    %598 = vmatpush.msra.mxu0 %v241
    %599 = vmatpush.msra.mxu0 %v239
    %600 = vmatmul.f32.gmra.mxu0 %v521
    %v601 = vpop.f32.mrf.mxu0
    %v602 = vadd.f32 %v582, %v601
    %603 = vdwg.mxu0
    %v604 = vtanh.pop %v562
    %v605 = vtanh.pop %v602
    %v606 = vld [vmem:[#allocation2 + $0x50] sm:$0xff]
    %v607 = vld [vmem:[#allocation2 + $0x58] sm:$0xff]
    %608 = vmatpush.msra.mxu0 %v236
    %609 = vmatpush.msra.mxu0 %v234
    %610 = vmatpush.msra.mxu0 %v232
    %611 = vmatpush.msra.mxu0 %v230
    %612 = vmatpush.msra.mxu0 %v228
    %613 = vmatpush.msra.mxu0 %v226
    %614 = vmatpush.msra.mxu0 %v224
    %615 = vmatpush.msra.mxu0 %v222
    %616 = vmatpush.msra.mxu0 %v220
    %617 = vmatpush.msra.mxu0 %v218
    %618 = vmatpush.msra.mxu0 %v216
    %619 = vmatpush.msra.mxu0 %v214
    %620 = vmatpush.msra.mxu0 %v212
    %621 = vmatpush.msra.mxu0 %v210
    %622 = vmatpush.msra.mxu0 %v208
    %623 = vmatpush.msra.mxu0 %v206
    %624 = vmatmul.f32.gmra.mxu0 %v604
    %v625 = vpop.f32.mrf.mxu0
    %v626 = vadd.f32 %v606, %v625
    %627 = vdwg.mxu0
    %628 = vmatpush.msra.mxu0 %v268
    %629 = vmatpush.msra.mxu0 %v266
    %630 = vmatpush.msra.mxu0 %v264
    %631 = vmatpush.msra.mxu0 %v262
    %632 = vmatpush.msra.mxu0 %v260
    %633 = vmatpush.msra.mxu0 %v258
    %634 = vmatpush.msra.mxu0 %v256
    %635 = vmatpush.msra.mxu0 %v254
    %636 = vmatpush.msra.mxu0 %v252
    %637 = vmatpush.msra.mxu0 %v250
    %638 = vmatpush.msra.mxu0 %v248
    %639 = vmatpush.msra.mxu0 %v246
    %640 = vmatpush.msra.mxu0 %v244
    %641 = vmatpush.msra.mxu0 %v242
    %642 = vmatpush.msra.mxu0 %v240
    %643 = vmatpush.msra.mxu0 %v238
    %644 = vmatmul.f32.gmra.mxu0 %v605
    %v645 = vpop.f32.mrf.mxu0
    %v646 = vadd.f32 %v626, %v645
    %647 = vdwg.mxu0
    %648 = vmatpush.msra.mxu0 %v237
    %649 = vmatpush.msra.mxu0 %v235
    %650 = vmatpush.msra.mxu0 %v233
    %651 = vmatpush.msra.mxu0 %v231
    %652 = vmatpush.msra.mxu0 %v229
    %653 = vmatpush.msra.mxu0 %v227
    %654 = vmatpush.msra.mxu0 %v225
    %655 = vmatpush.msra.mxu0 %v223
    %656 = vmatpush.msra.mxu0 %v221
    %657 = vmatpush.msra.mxu0 %v219
    %658 = vmatpush.msra.mxu0 %v217
    %659 = vmatpush.msra.mxu0 %v215
    %660 = vmatpush.msra.mxu0 %v213
    %661 = vmatpush.msra.mxu0 %v211
    %662 = vmatpush.msra.mxu0 %v209
    %663 = vmatpush.msra.mxu0 %v207
    %664 = vmatmul.f32.gmra.mxu0 %v604
    %v665 = vpop.f32.mrf.mxu0
    %v666 = vadd.f32 %v607, %v665
    %667 = vdwg.mxu0
    %668 = vmatpush.msra.mxu0 %v269
    %669 = vmatpush.msra.mxu0 %v267
    %670 = vmatpush.msra.mxu0 %v265
    %671 = vmatpush.msra.mxu0 %v263
    %672 = vmatpush.msra.mxu0 %v261
    %673 = vmatpush.msra.mxu0 %v259
    %674 = vmatpush.msra.mxu0 %v257
    %675 = vmatpush.msra.mxu0 %v255
    %676 = vmatpush.msra.mxu0 %v253
    %677 = vmatpush.msra.mxu0 %v251
    %678 = vmatpush.msra.mxu0 %v249
    %679 = vmatpush.msra.mxu0 %v247
    %680 = vmatpush.msra.mxu0 %v245
    %681 = vmatpush.msra.mxu0 %v243
    %682 = vmatpush.msra.mxu0 %v241
    %683 = vmatpush.msra.mxu0 %v239
    %684 = vmatmul.f32.gmra.mxu0 %v605
    %v685 = vpop.f32.mrf.mxu0
    %v686 = vadd.f32 %v666, %v685
    %687 = vdwg.mxu0
    %v688 = vtanh.pop %v646
    %v689 = vtanh.pop %v686
    %v690 = vld [vmem:[#allocation2 + $0x60] sm:$0xff]
    %v691 = vld [vmem:[#allocation2 + $0x68] sm:$0xff]
    %692 = vmatpush.msra.mxu0 %v236
    %693 = vmatpush.msra.mxu0 %v234
    %694 = vmatpush.msra.mxu0 %v232
    %695 = vmatpush.msra.mxu0 %v230
    %696 = vmatpush.msra.mxu0 %v228
    %697 = vmatpush.msra.mxu0 %v226
    %698 = vmatpush.msra.mxu0 %v224
    %699 = vmatpush.msra.mxu0 %v222
    %700 = vmatpush.msra.mxu0 %v220
    %701 = vmatpush.msra.mxu0 %v218
    %702 = vmatpush.msra.mxu0 %v216
    %703 = vmatpush.msra.mxu0 %v214
    %704 = vmatpush.msra.mxu0 %v212
    %705 = vmatpush.msra.mxu0 %v210
    %706 = vmatpush.msra.mxu0 %v208
    %707 = vmatpush.msra.mxu0 %v206
    %708 = vmatmul.f32.gmra.mxu0 %v688
    %v709 = vpop.f32.mrf.mxu0
    %v710 = vadd.f32 %v690, %v709
    %711 = vdwg.mxu0
    %712 = vmatpush.msra.mxu0 %v268
    %713 = vmatpush.msra.mxu0 %v266
    %714 = vmatpush.msra.mxu0 %v264
    %715 = vmatpush.msra.mxu0 %v262
    %716 = vmatpush.msra.mxu0 %v260
    %717 = vmatpush.msra.mxu0 %v258
    %718 = vmatpush.msra.mxu0 %v256
    %719 = vmatpush.msra.mxu0 %v254
    %720 = vmatpush.msra.mxu0 %v252
    %721 = vmatpush.msra.mxu0 %v250
    %722 = vmatpush.msra.mxu0 %v248
    %723 = vmatpush.msra.mxu0 %v246
    %724 = vmatpush.msra.mxu0 %v244
    %725 = vmatpush.msra.mxu0 %v242
    %726 = vmatpush.msra.mxu0 %v240
    %727 = vmatpush.msra.mxu0 %v238
    %728 = vmatmul.f32.gmra.mxu0 %v689
    %v729 = vpop.f32.mrf.mxu0
    %v730 = vadd.f32 %v710, %v729
    %731 = vdwg.mxu0
    %732 = vmatpush.msra.mxu0 %v237
    %733 = vmatpush.msra.mxu0 %v235
    %734 = vmatpush.msra.mxu0 %v233
    %735 = vmatpush.msra.mxu0 %v231
    %736 = vmatpush.msra.mxu0 %v229
    %737 = vmatpush.msra.mxu0 %v227
    %738 = vmatpush.msra.mxu0 %v225
    %739 = vmatpush.msra.mxu0 %v223
    %740 = vmatpush.msra.mxu0 %v221
    %741 = vmatpush.msra.mxu0 %v219
    %742 = vmatpush.msra.mxu0 %v217
    %743 = vmatpush.msra.mxu0 %v215
    %744 = vmatpush.msra.mxu0 %v213
    %745 = vmatpush.msra.mxu0 %v211
    %746 = vmatpush.msra.mxu0 %v209
    %747 = vmatpush.msra.mxu0 %v207
    %748 = vmatmul.f32.gmra.mxu0 %v688
    %v749 = vpop.f32.mrf.mxu0
    %v750 = vadd.f32 %v691, %v749
    %751 = vdwg.mxu0
    %752 = vmatpush.msra.mxu0 %v269
    %753 = vmatpush.msra.mxu0 %v267
    %754 = vmatpush.msra.mxu0 %v265
    %755 = vmatpush.msra.mxu0 %v263
    %756 = vmatpush.msra.mxu0 %v261
    %757 = vmatpush.msra.mxu0 %v259
    %758 = vmatpush.msra.mxu0 %v257
    %759 = vmatpush.msra.mxu0 %v255
    %760 = vmatpush.msra.mxu0 %v253
    %761 = vmatpush.msra.mxu0 %v251
    %762 = vmatpush.msra.mxu0 %v249
    %763 = vmatpush.msra.mxu0 %v247
    %764 = vmatpush.msra.mxu0 %v245
    %765 = vmatpush.msra.mxu0 %v243
    %766 = vmatpush.msra.mxu0 %v241
    %767 = vmatpush.msra.mxu0 %v239
    %768 = vmatmul.f32.gmra.mxu0 %v689
    %v769 = vpop.f32.mrf.mxu0
    %v770 = vadd.f32 %v750, %v769
    %771 = vdwg.mxu0
    %v772 = vtanh.pop %v730
    %v773 = vtanh.pop %v770
    %v774 = vld [vmem:[#allocation2 + $0x70] sm:$0xff]
    %v775 = vld [vmem:[#allocation2 + $0x78] sm:$0xff]
    %776 = vmatpush.msra.mxu0 %v236
    %777 = vmatpush.msra.mxu0 %v234
    %778 = vmatpush.msra.mxu0 %v232
    %779 = vmatpush.msra.mxu0 %v230
    %780 = vmatpush.msra.mxu0 %v228
    %781 = vmatpush.msra.mxu0 %v226
    %782 = vmatpush.msra.mxu0 %v224
    %783 = vmatpush.msra.mxu0 %v222
    %784 = vmatpush.msra.mxu0 %v220
    %785 = vmatpush.msra.mxu0 %v218
    %786 = vmatpush.msra.mxu0 %v216
    %787 = vmatpush.msra.mxu0 %v214
    %788 = vmatpush.msra.mxu0 %v212
    %789 = vmatpush.msra.mxu0 %v210
    %790 = vmatpush.msra.mxu0 %v208
    %791 = vmatpush.msra.mxu0 %v206
    %792 = vmatmul.f32.gmra.mxu0 %v772
    %v793 = vpop.f32.mrf.mxu0
    %v794 = vadd.f32 %v774, %v793
    %795 = vdwg.mxu0
    %796 = vmatpush.msra.mxu0 %v268
    %797 = vmatpush.msra.mxu0 %v266
    %798 = vmatpush.msra.mxu0 %v264
    %799 = vmatpush.msra.mxu0 %v262
    %800 = vmatpush.msra.mxu0 %v260
    %801 = vmatpush.msra.mxu0 %v258
    %802 = vmatpush.msra.mxu0 %v256
    %803 = vmatpush.msra.mxu0 %v254
    %804 = vmatpush.msra.mxu0 %v252
    %805 = vmatpush.msra.mxu0 %v250
    %806 = vmatpush.msra.mxu0 %v248
    %807 = vmatpush.msra.mxu0 %v246
    %808 = vmatpush.msra.mxu0 %v244
    %809 = vmatpush.msra.mxu0 %v242
    %810 = vmatpush.msra.mxu0 %v240
    %811 = vmatpush.msra.mxu0 %v238
    %812 = vmatmul.f32.gmra.mxu0 %v773
    %v813 = vpop.f32.mrf.mxu0
    %v814 = vadd.f32 %v794, %v813
    %815 = vdwg.mxu0
    %816 = vmatpush.msra.mxu0 %v237
    %817 = vmatpush.msra.mxu0 %v235
    %818 = vmatpush.msra.mxu0 %v233
    %819 = vmatpush.msra.mxu0 %v231
    %820 = vmatpush.msra.mxu0 %v229
    %821 = vmatpush.msra.mxu0 %v227
    %822 = vmatpush.msra.mxu0 %v225
    %823 = vmatpush.msra.mxu0 %v223
    %824 = vmatpush.msra.mxu0 %v221
    %825 = vmatpush.msra.mxu0 %v219
    %826 = vmatpush.msra.mxu0 %v217
    %827 = vmatpush.msra.mxu0 %v215
    %828 = vmatpush.msra.mxu0 %v213
    %829 = vmatpush.msra.mxu0 %v211
    %830 = vmatpush.msra.mxu0 %v209
    %831 = vmatpush.msra.mxu0 %v207
    %832 = vmatmul.f32.gmra.mxu0 %v772
    %v833 = vpop.f32.mrf.mxu0
    %v834 = vadd.f32 %v775, %v833
    %835 = vdwg.mxu0
    %836 = vmatpush.msra.mxu0 %v269
    %837 = vmatpush.msra.mxu0 %v267
    %838 = vmatpush.msra.mxu0 %v265
    %839 = vmatpush.msra.mxu0 %v263
    %840 = vmatpush.msra.mxu0 %v261
    %841 = vmatpush.msra.mxu0 %v259
    %842 = vmatpush.msra.mxu0 %v257
    %843 = vmatpush.msra.mxu0 %v255
    %844 = vmatpush.msra.mxu0 %v253
    %845 = vmatpush.msra.mxu0 %v251
    %846 = vmatpush.msra.mxu0 %v249
    %847 = vmatpush.msra.mxu0 %v247
    %848 = vmatpush.msra.mxu0 %v245
    %849 = vmatpush.msra.mxu0 %v243
    %850 = vmatpush.msra.mxu0 %v241
    %851 = vmatpush.msra.mxu0 %v239
    %852 = vmatmul.f32.gmra.mxu0 %v773
    %v853 = vpop.f32.mrf.mxu0
    %v854 = vadd.f32 %v834, %v853
    %855 = vdwg.mxu0
    %v856 = vtanh.pop %v814
    %v857 = vtanh.pop %v854
    %v858 = vld [vmem:[%s4] sm:$0x1]
    %v860 = vperm.slane %v858, 0
    %862 = vmatpush.msra.mxu0 %v237
    %863 = vmatpush.msra.mxu0 %v235
    %864 = vmatpush.msra.mxu0 %v233
    %865 = vmatpush.msra.mxu0 %v231
    %866 = vmatpush.msra.mxu0 %v229
    %867 = vmatpush.msra.mxu0 %v227
    %868 = vmatpush.msra.mxu0 %v225
    %869 = vmatpush.msra.mxu0 %v223
    %870 = vmatpush.msra.mxu0 %v221
    %871 = vmatpush.msra.mxu0 %v219
    %872 = vmatpush.msra.mxu0 %v217
    %873 = vmatpush.msra.mxu0 %v215
    %874 = vmatpush.msra.mxu0 %v213
    %875 = vmatpush.msra.mxu0 %v211
    %876 = vmatpush.msra.mxu0 %v209
    %877 = vmatpush.msra.mxu0 %v207
    %878 = vmatmul.f32.gmra.mxu0 %v856
    %v879 = vpop.f32.mrf.mxu0
    %v880 = vadd.f32 %v860, %v879
    %881 = vdwg.mxu0
    %882 = vmatpush.msra.mxu0 %v269
    %883 = vmatpush.msra.mxu0 %v267
    %884 = vmatpush.msra.mxu0 %v265
    %885 = vmatpush.msra.mxu0 %v263
    %886 = vmatpush.msra.mxu0 %v261
    %887 = vmatpush.msra.mxu0 %v259
    %888 = vmatpush.msra.mxu0 %v257
    %889 = vmatpush.msra.mxu0 %v255
    %890 = vmatpush.msra.mxu0 %v253
    %891 = vmatpush.msra.mxu0 %v251
    %892 = vmatpush.msra.mxu0 %v249
    %893 = vmatpush.msra.mxu0 %v247
    %894 = vmatpush.msra.mxu0 %v245
    %895 = vmatpush.msra.mxu0 %v243
    %896 = vmatpush.msra.mxu0 %v241
    %897 = vmatpush.msra.mxu0 %v239
    %898 = vmatmul.f32.gmra.mxu0 %v857
    %v899 = vpop.f32.mrf.mxu0
    %v900 = vadd.f32 %v880, %v899
    %901 = vdwg.mxu0
    %v902 = vtanh.pop %v900
    %v903 = vld [vmem:[%s5] sm:$0x1]
    %v905 = vperm.slane %v903, 0
    %v907 = vmul.f32 %v902, %v905
    %908 = vadd.xlane.f32.xlu0 %v907
    %v909 = vpop.xlane.xlu0 %908
    %v910 = vld [vmem:[#allocation3] sm:$0x1]
    %v912 = vperm.slane %v910, 0
    %v914 = vadd.f32 %v909, %v912
    %vm915 = vcmask 7168
    %916 = vst.msk [vmem:[%s7] sm:$0xff] %vm915, %v914
    // Predicated region
    $region38: #{rnn_model_forward.1} parent=1 // pred_check
      _
    $region39: #{rnn_model_forward.1} parent=1 // pred_check_branch
      %918 = sbr.rel (0) target = $region41
    $region40: #{rnn_model_forward.1} parent=1 // pred_region
      _
    $region41: #{rnn_model_forward.1} parent=1 // pred_fallthru
      _
    // Predicated region
    $region42: #{rnn_model_forward.1} parent=1 // pred_check
      _
    $region43: #{rnn_model_forward.1} parent=1 // pred_check_branch
      %920 = sbr.rel (0) target = $region45
    $region44: #{rnn_model_forward.1} parent=1 // pred_region
      _
    $region45: #{rnn_model_forward.1} parent=1 // pred_fallthru
      _
    %921 = vsyncpa [#allocation5], 1
    %922 = vsyncpa [#allocation7], 1

</llo_original>
